<compile_context>
chip_gen: v6e
topology: v6e:2x2x1
jax: 0.10.0
libtpu: 0.0.40
codegen_flags: <defaults>
</compile_context>

<pallas_src>
import functools

import jax
import jax.numpy as jnp
import numpy as np
from jax.experimental import pallas as pl
from jax.experimental.pallas import tpu as pltpu


def _round_up(v: int, m: int) -> int:
    return ((v + m - 1) // m) * m


def _energy_partial_kernel(x_ref, o_ref, *, inv_temp: float, n_rows: int, tile_rows: int):
    """Per-tile partial sum of logsumexp(x * inv_temp, axis=1)."""
    i = pl.program_id(0)

    x = x_ref[...].astype(jnp.float32) * inv_temp               # (tile_rows, C)

    # Numerically-stable logsumexp over the class (lane) axis.
    m = jnp.max(x, axis=1, keepdims=True)                        # (tile_rows, 1)
    s = jnp.sum(jnp.exp(x - m), axis=1, keepdims=True)           # (tile_rows, 1)
    lse = m + jnp.log(s)                                         # (tile_rows, 1)

    # Mask rows past the true batch size (partial last tile reads padded garbage).
    row = i * tile_rows + jax.lax.broadcasted_iota(jnp.int32, lse.shape, 0)
    lse = jnp.where(row < n_rows, lse, 0.0)

    partial = jnp.sum(lse)                                       # scalar

    # Lane-dense, vreg-sized write (unmasked store); wrapper reads [i, 0, 0].
    o_ref[...] = jnp.full(o_ref.shape, partial, dtype=jnp.float32)


def energy_loss(x: jax.Array, temp_factor: float = 1.0, tile_rows: int | None = None) -> jax.Array:
    """Returns a scalar: 1 / mean(temp_factor * logsumexp(x / temp_factor, axis=1))."""
    assert x.ndim == 2, "expected (batch, classes) logits"
    n, c = x.shape
    itemsize = jnp.dtype(x.dtype).itemsize

    # Sublane packing: 8 rows for f32, 16 for bf16, 32 for 8-bit dtypes.
    pack = max(8, 32 // itemsize)

    if tile_rows is None:
        # Keep 2 (double-buffer) x tile_rows x C x itemsize well under the scoped
        # VMEM limit even on v7x (64 MiB physical / 32 MiB scoped).
        budget_bytes = 12 * 1024 * 1024
        max_tn = max(pack, (budget_bytes // (2 * c * itemsize)) // pack * pack)
        tile_rows = min(512, max_tn, _round_up(n, pack))
    tile_rows = max(pack, _round_up(tile_rows, pack))

    grid = pl.cdiv(n, tile_rows)

    partials = pl.pallas_call(
        functools.partial(
            _energy_partial_kernel,
            inv_temp=1.0 / float(temp_factor),
            n_rows=n,
            tile_rows=tile_rows,
        ),
        out_shape=jax.ShapeDtypeStruct((grid, 8, 128), jnp.float32),
        grid=(grid,),
        in_specs=[pl.BlockSpec((tile_rows, c), lambda i: (i, 0))],
        out_specs=pl.BlockSpec((1, 8, 128), lambda i: (i, 0, 0)),
        compiler_params=pltpu.CompilerParams(
            dimension_semantics=("parallel",),
            vmem_limit_bytes=32 * 1024 * 1024,
        ),
    )(x)

    # Second stage (tiny): sum per-tile partials, apply temp_factor once, invert.
    total_lse = jnp.sum(partials[:, 0, 0])
    mean_e = (float(temp_factor) * total_lse) / float(n)
    return 1.0 / mean_e


def _energy_loss_ref(x, temp_factor=1.0):
    e = temp_factor * jax.scipy.special.logsumexp(
        x.astype(jnp.float32) / temp_factor, axis=1
    )
    return 1.0 / jnp.mean(e)


if __name__ == "__main__":
    key = jax.random.PRNGKey(0)

    # Case 1: small logits tensor matching the module spec (batch=8, classes=32).
    x1 = jax.random.normal(key, (8, 32), dtype=jnp.float32)
    loss1 = energy_loss(x1, temp_factor=1.0)
    jax.block_until_ready(loss1)
    np.testing.assert_allclose(
        np.asarray(loss1), np.asarray(_energy_loss_ref(x1, 1.0)), rtol=1e-5, atol=1e-6
    )

    # Case 2: multi-tile grid with a partial last tile + non-unit temp_factor.
    key2 = jax.random.PRNGKey(1)
    x2 = jax.random.normal(key2, (200, 96), dtype=jnp.float32) * 3.0
    loss2 = energy_loss(x2, temp_factor=2.0, tile_rows=64)  # grid=4, last tile partial
    jax.block_until_ready(loss2)
    np.testing.assert_allclose(
        np.asarray(loss2), np.asarray(_energy_loss_ref(x2, 2.0)), rtol=1e-5, atol=1e-6
    )

    print("KERNEL_OK")
</pallas_src>

<mosaic_0001>
module attributes {stable_mosaic.version = 11 : i64} {
  func.func @_energy_partial_kernel(%arg0: i32, %arg1: memref<8x32xf32, #tpu.memory_space<vmem>>, %arg2: memref<1x8x128xf32, #tpu.memory_space<vmem>>) attributes {dimension_semantics = [#tpu.dimension_semantics<parallel>], iteration_bounds = array<i64: 1>, scalar_prefetch = 0 : i64, scratch_operands = 0 : i64, tpu.core_type = #tpu.core_type<tc>, window_params = [{transform_indices = @transform_0, window_bounds = array<i64: 8, 32>}, {transform_indices = @transform_1, window_bounds = array<i64: 1, 8, 128>}]} {
    %c0 = arith.constant 0 : index
    %c0_0 = arith.constant 0 : index
    %0 = vector.load %arg1[%c0, %c0_0] : memref<8x32xf32, #tpu.memory_space<vmem>>, vector<8x32xf32>
    %cst = arith.constant 1.000000e+00 : f32
    %1 = vector.broadcast %cst : f32 to vector<8x32xf32>
    %2 = arith.mulf %0, %1 : vector<8x32xf32>
    %cst_1 = arith.constant dense<0xFF800000> : vector<8xf32>
    %3 = vector.multi_reduction <maximumf>, %2, %cst_1 [1] : vector<8x32xf32> to vector<8xf32>
    %4 = vector.shape_cast %3 : vector<8xf32> to vector<8x1xf32>
    %5 = vector.broadcast %4 : vector<8x1xf32> to vector<8x32xf32>
    %6 = arith.subf %2, %5 : vector<8x32xf32>
    %7 = math.exp %6 : vector<8x32xf32>
    %cst_2 = arith.constant dense<0.000000e+00> : vector<8xf32>
    %8 = vector.multi_reduction <add>, %7, %cst_2 [1] : vector<8x32xf32> to vector<8xf32>
    %9 = vector.shape_cast %8 : vector<8xf32> to vector<8x1xf32>
    %10 = math.log %9 : vector<8x1xf32>
    %11 = arith.addf %4, %10 : vector<8x1xf32>
    %c8_i32 = arith.constant 8 : i32
    %12 = arith.muli %arg0, %c8_i32 : i32
    %13 = tpu.iota {dimensions = array<i32: 0>} : vector<8x1xi32>
    %14 = vector.broadcast %12 : i32 to vector<8x1xi32>
    %15 = arith.addi %14, %13 : vector<8x1xi32>
    %c8_i32_3 = arith.constant 8 : i32
    %16 = vector.broadcast %c8_i32_3 : i32 to vector<8x1xi32>
    %17 = arith.cmpi slt, %15, %16 : vector<8x1xi32>
    %cst_4 = arith.constant 0.000000e+00 : f32
    %18 = vector.broadcast %cst_4 : f32 to vector<8x1xf32>
    %19 = arith.select %17, %11, %18 : vector<8x1xi1>, vector<8x1xf32>
    %20 = vector.shape_cast %19 : vector<8x1xf32> to vector<1x8x1xf32>
    %cst_5 = arith.constant dense<0.000000e+00> : vector<1xf32>
    %21 = vector.multi_reduction <add>, %20, %cst_5 [1, 2] : vector<1x8x1xf32> to vector<1xf32>
    %22 = vector.shape_cast %21 : vector<1xf32> to vector<1x1x1xf32>
    %23 = vector.extract %22[0, 0, 0] : f32 from vector<1x1x1xf32>
    %24 = vector.broadcast %23 : f32 to vector<1x8x128xf32>
    %c0_6 = arith.constant 0 : index
    %c0_7 = arith.constant 0 : index
    %c0_8 = arith.constant 0 : index
    %25 = vector.load %arg2[%c0_6, %c0_7, %c0_8] : memref<1x8x128xf32, #tpu.memory_space<vmem>>, vector<1x8x128xf32>
    tpu.vector_store %arg2[%c0_6, %c0_7, %c0_8], %24 {strides = array<i32>} : memref<1x8x128xf32, #tpu.memory_space<vmem>>, vector<1x8x128xf32>,
    return
  }
  func.func @transform_0(%arg0: i32) -> (i32, i32) {
    %c0_i32 = arith.constant 0 : i32
    %c0_i32_0 = arith.constant 0 : i32
    return %arg0, %c0_i32 : i32, i32
  }
  func.func @transform_1(%arg0: i32) -> (i32, i32, i32) {
    %c0_i32 = arith.constant 0 : i32
    %c0_i32_0 = arith.constant 0 : i32
    %c0_i32_1 = arith.constant 0 : i32
    return %arg0, %c0_i32, %c0_i32_0 : i32, i32, i32
  }
}

</mosaic_0001>

<llo_original>
// kernel: tpu_custom_call.1
$region0: #{tpu_custom_call.1}
  #allocation0 [shape = 'u32[]', space=smem, size = 0x4, offset = 0x4, fixed_abs, tag = 'smem constant byte address 0x4 - core index']
  #allocation1 [shape = 'u32[144,128]{1,0:T(1,128)}', space=vmem, size = 0x12000, scoped, tag = 'internal scratch']
  %s0 = inlined_call_operand.hbm [shape: f32[8,32], index: 0, kind: input, shape index: {}]
  %s1 = inlined_call_operand.hbm [shape: f32[1,8,128], index: 1, kind: output, shape index: {}]
  %s2 = sld [smem:[#allocation0]]
  $region18: #{tpu_custom_call.1} parent=0
    _
  %s4 = ssub.s32 1, %s2
  %s5 = scalar_select 0, %s4, %s2
  $region1: #{tpu_custom_call.1} parent=0
    #allocation2 [shape = 'u8[4096]{0}', space=vmem, size = 0x1000, scoped, tag = 'input window, operand 0, single buffered']
    #allocation3 [shape = 's32[1]{0}', space=sflag, size = 0x4, scoped, tag = 'scoped memory for tpu_custom_call.1']
    #allocation4 [shape = 's32[1]{0}', space=sflag, size = 0x4, scoped, tag = 'scoped memory for tpu_custom_call.1']
    #allocation5 [shape = 'u8[4096]{0}', space=vmem, size = 0x1000, scoped, tag = 'output window, operand 0, single buffered']
    %6 = vsyncpa [#allocation3], 0
    %7 = vsyncpa [#allocation4], 0
    // Predicated region
    $region2: #{tpu_custom_call.1} parent=1 // pred_check
      _
    $region3: #{tpu_custom_call.1} parent=1 // pred_check_branch
      %9 = sbr.rel (0) target = $region5
    $region4: #{tpu_custom_call.1} parent=1 // pred_region
      %s11 = ssub.s32 128, 128
      %12 = vsyncadd [#allocation3], %s11
      %s14 = sshll.u32 [#allocation2], 4
      %s15 = int_to_ptr.vmem [resolvable:$true] %s14
      %17 = dma.hbm_to_vmem [thread:$0]  %s0, 128, %s15, [#allocation3]
    $region5: #{tpu_custom_call.1} parent=1 // pred_fallthru
      _
    // Predicated region
    $region6: #{tpu_custom_call.1} parent=1 // pred_check
      _
    $region7: #{tpu_custom_call.1} parent=1 // pred_check_branch
      %19 = sbr.rel (0) target = $region9
    $region8: #{tpu_custom_call.1} parent=1 // pred_region
      %20 = dma.done [#allocation3], 128
    $region9: #{tpu_custom_call.1} parent=1 // pred_fallthru
      _
    %v21 = vld [vmem:[#allocation2] sm:$0xff]
    %vm22 = vcmask 261120
    %v23 = vsel %vm22, %v21, -inf
    %24 = vmax.xlane.f32.xlu0 %v23
    %v25 = vpop.xlane.xlu0 %24
    %v26 = vsub.f32 %v21, %v25
    %v27 = vmul.f32 %v26, 1.442695
    %v28 = vpow.pop %v27
    %v29 = vsel %vm22, %v28, 0.0
    %30 = vadd.xlane.f32.xlu0 %v29
    %v31 = vpop.xlane.xlu0 %30
    %v32 = vlog2.pop %v31
    %v33 = vmul.f32 %v32, 0.6931472
    %v34 = vadd.f32 %v25, %v33
    %s35 = smul.u32 0, 8
    %v36 = vlaneseq
    %v37 = vshrl.u32 %v36, 7
    %v38 = vstv %s35
    %v39 = vadd.s32 %v38, %v37
    %vm40 = vcmp.lt.s32.totalorder %v39, 8
    %v41 = vsel %vm40, %v34, 0.0
    %vm42 = vcmask 7168
    %v43 = vsel %vm42, %v41, 0.0
    %44 = vadd.xlane.f32.xlu0 %v43
    %v45 = vpop.xlane.xlu0 %44
    %v46 = vrot.slane %v45, 4
    %v47 = vadd.f32 %v45, %v46
    %v48 = vrot.slane %v47, 2
    %v49 = vadd.f32 %v47, %v48
    %v50 = vrot.slane %v49, 1
    %v51 = vadd.f32 %v49, %v50
    %s52 = vtos %v51
    %v53 = vstv %s52
    %54 = vst [vmem:[#allocation5] sm:$0xff] %v53
    // Predicated region
    $region10: #{tpu_custom_call.1} parent=1 // pred_check
      _
    $region11: #{tpu_custom_call.1} parent=1 // pred_check_branch
      %56 = sbr.rel (0) target = $region13
    $region12: #{tpu_custom_call.1} parent=1 // pred_region
      %s58 = ssub.s32 128, 128
      %59 = vsyncadd [#allocation4], %s58
      %s61 = sshll.u32 [#allocation5], 4
      %s62 = int_to_ptr.vmem [resolvable:$true] %s61
      %64 = dma.vmem_to_hbm [thread:$0]  %s62, 128, %s1, [#allocation4]
    $region13: #{tpu_custom_call.1} parent=1 // pred_fallthru
      _
    // Predicated region
    $region14: #{tpu_custom_call.1} parent=1 // pred_check
      _
    $region15: #{tpu_custom_call.1} parent=1 // pred_check_branch
      %66 = sbr.rel (0) target = $region17
    $region16: #{tpu_custom_call.1} parent=1 // pred_region
      %67 = dma.done [#allocation4], 128
    $region17: #{tpu_custom_call.1} parent=1 // pred_fallthru
      _
    %68 = vsyncpa [#allocation3], 1
    %69 = vsyncpa [#allocation4], 1

</llo_original>
